<compile_context>
chip_gen: v5e
topology: v5e:2x2
jax: 0.10.0
libtpu: 0.0.40
codegen_flags: <defaults>
</compile_context>

<pallas_src>
import math
import jax
import jax.numpy as jnp
from jax.experimental import pallas as pl
from jax.experimental.pallas import tpu as pltpu

_GELU_C = math.sqrt(2.0 / math.pi)


def _classifier_kernel(x_ref, w_ref, b_ref, o_ref):
    # x_ref: (TB, Z) f32   w_ref: (Z, Np) bf16   b_ref: (1, Np) f32   o_ref: (TB, Np) f32
    x = x_ref[...]                                   # already f32, no cast needed
    g = 0.5 * x * (1.0 + jnp.tanh(_GELU_C * (x + 0.044715 * (x * x * x))))
    acc = jnp.dot(g.astype(jnp.bfloat16), w_ref[...],
                  preferred_element_type=jnp.float32)   # bf16 operands, f32 accumulation
    o_ref[...] = (acc + b_ref[...]).astype(o_ref.dtype)  # (1, Np) bias broadcasts over rows


def multi_classifier_cifar100(x, w, b, *, tile_b=512):
    """x: [B, Z] float32; w: [Z, N]; b: [N] -> [B, N] float32."""
    B, Z = x.shape
    Zw, N = w.shape
    assert Z == Zw and b.shape == (N,)

    # --- lane-dense padding of the class dimension (100 -> 128) ---------------
    n_pad = ((N + 127) // 128) * 128
    w_p = jnp.pad(w, ((0, 0), (0, n_pad - N))).astype(jnp.bfloat16)
    b_p = jnp.pad(b, (0, n_pad - N)).reshape(1, n_pad).astype(jnp.float32)

    # --- batch tiling: TB rows per grid step, multiple of 8 -------------------
    tb = min(tile_b, max(8, ((B + 7) // 8) * 8))
    b_padded = ((B + tb - 1) // tb) * tb
    x_p = jnp.pad(x.astype(jnp.float32), ((0, b_padded - B), (0, 0)))
    n_tiles = b_padded // tb

    out = pl.pallas_call(
        _classifier_kernel,
        out_shape=jax.ShapeDtypeStruct((b_padded, n_pad), jnp.float32),
        grid_spec=pl.GridSpec(
            grid=(n_tiles,),
            in_specs=[
                pl.BlockSpec((tb, Z), lambda i: (i, 0)),       # x: pipelined over batch
                pl.BlockSpec((Z, n_pad), lambda i: (0, 0)),    # weight: VMEM-resident
                pl.BlockSpec((1, n_pad), lambda i: (0, 0)),    # bias:   VMEM-resident
            ],
            out_specs=pl.BlockSpec((tb, n_pad), lambda i: (i, 0)),
        ),
        compiler_params=pltpu.CompilerParams(
            dimension_semantics=("parallel",)),                # shards batch over v7x's 2 TCs
    )(x_p, w_p, b_p)

    return out[:B, :N]


def reference(x, w, b):
    g = 0.5 * x * (1.0 + jnp.tanh(_GELU_C * (x + 0.044715 * x ** 3)))
    return g @ w + b


if __name__ == "__main__":
    key = jax.random.PRNGKey(0)
    kx, kw, kb = jax.random.split(key, 3)

    batch, z_dim, n_classes = 8, 32, 100   # small shapes consistent with the module

    x = jax.random.normal(kx, (batch, z_dim), dtype=jnp.float32)

    # Deterministic parameter init (PyTorch nn.Linear-style uniform bounds).
    bound = 1.0 / math.sqrt(z_dim)
    w = jax.random.uniform(kw, (z_dim, n_classes), dtype=jnp.float32,
                           minval=-bound, maxval=bound)
    b = jax.random.uniform(kb, (n_classes,), dtype=jnp.float32,
                           minval=-bound, maxval=bound)

    out = multi_classifier_cifar100(x, w, b)
    out = jax.block_until_ready(out)

    ref = reference(x, w, b)
    assert out.shape == (batch, n_classes)
    # bf16 matmul operands with f32 accumulation: tolerance relaxed vs exact f32 path.
    assert jnp.allclose(out, ref, atol=5e-2, rtol=2e-2), "mismatch vs reference"

    print("KERNEL_OK")
</pallas_src>

<mosaic_0001>
module attributes {stable_mosaic.version = 11 : i64} {
  func.func @_classifier_kernel(%arg0: i32, %arg1: memref<8x32xf32, #tpu.memory_space<vmem>>, %arg2: memref<32x128xbf16, #tpu.memory_space<vmem>>, %arg3: memref<1x128xf32, #tpu.memory_space<vmem>>, %arg4: memref<8x128xf32, #tpu.memory_space<vmem>>) attributes {dimension_semantics = [#tpu.dimension_semantics<parallel>], iteration_bounds = array<i64: 1>, scalar_prefetch = 0 : i64, scratch_operands = 0 : i64, tpu.core_type = #tpu.core_type<tc>, window_params = [{transform_indices = @transform_0, window_bounds = array<i64: 8, 32>}, {pipeline_mode = #tpu.pipeline_mode<synchronous>, transform_indices = @transform_1, window_bounds = array<i64: 32, 128>}, {pipeline_mode = #tpu.pipeline_mode<synchronous>, transform_indices = @transform_2, window_bounds = array<i64: 1, 128>}, {transform_indices = @transform_3, window_bounds = array<i64: 8, 128>}]} {
    %c0 = arith.constant 0 : index
    %c0_0 = arith.constant 0 : index
    %0 = vector.load %arg1[%c0, %c0_0] : memref<8x32xf32, #tpu.memory_space<vmem>>, vector<8x32xf32>
    %cst = arith.constant 5.000000e-01 : f32
    %1 = vector.broadcast %cst : f32 to vector<8x32xf32>
    %2 = arith.mulf %1, %0 : vector<8x32xf32>
    %3 = arith.mulf %0, %0 : vector<8x32xf32>
    %4 = arith.mulf %3, %0 : vector<8x32xf32>
    %cst_1 = arith.constant 4.471500e-02 : f32
    %5 = vector.broadcast %cst_1 : f32 to vector<8x32xf32>
    %6 = arith.mulf %5, %4 : vector<8x32xf32>
    %7 = arith.addf %0, %6 : vector<8x32xf32>
    %cst_2 = arith.constant 0.797884583 : f32
    %8 = vector.broadcast %cst_2 : f32 to vector<8x32xf32>
    %9 = arith.mulf %8, %7 : vector<8x32xf32>
    %10 = math.tanh %9 : vector<8x32xf32>
    %cst_3 = arith.constant 1.000000e+00 : f32
    %11 = vector.broadcast %cst_3 : f32 to vector<8x32xf32>
    %12 = arith.addf %11, %10 : vector<8x32xf32>
    %13 = arith.mulf %2, %12 : vector<8x32xf32>
    %14 = arith.truncf %13 : vector<8x32xf32> to vector<8x32xbf16>
    %c0_4 = arith.constant 0 : index
    %c0_5 = arith.constant 0 : index
    %15 = vector.load %arg2[%c0_4, %c0_5] : memref<32x128xbf16, #tpu.memory_space<vmem>>, vector<32x128xbf16>
    %cst_6 = arith.constant dense<0.000000e+00> : vector<8x128xf32>
    %16 = tpu.matmul %14, %15, %cst_6 {dimension_numbers = #tpu.dot_dimension_numbers<[1], [0], [0], [1], [0, 0, 1, 1], [], []>} : vector<8x32xbf16>, vector<32x128xbf16>, vector<8x128xf32> -> vector<8x128xf32>
    %c0_7 = arith.constant 0 : index
    %c0_8 = arith.constant 0 : index
    %17 = vector.load %arg3[%c0_7, %c0_8] : memref<1x128xf32, #tpu.memory_space<vmem>>, vector<1x128xf32>
    %18 = vector.broadcast %17 : vector<1x128xf32> to vector<8x128xf32>
    %19 = arith.addf %16, %18 : vector<8x128xf32>
    %c0_9 = arith.constant 0 : index
    %c0_10 = arith.constant 0 : index
    %20 = vector.load %arg4[%c0_9, %c0_10] : memref<8x128xf32, #tpu.memory_space<vmem>>, vector<8x128xf32>
    tpu.vector_store %arg4[%c0_9, %c0_10], %19 {strides = array<i32>} : memref<8x128xf32, #tpu.memory_space<vmem>>, vector<8x128xf32>,
    return
  }
  func.func @transform_0(%arg0: i32) -> (i32, i32) {
    %c0_i32 = arith.constant 0 : i32
    %c0_i32_0 = arith.constant 0 : i32
    return %arg0, %c0_i32 : i32, i32
  }
  func.func @transform_1(%arg0: i32) -> (i32, i32) {
    %c0_i32 = arith.constant 0 : i32
    %c0_i32_0 = arith.constant 0 : i32
    %c0_i32_1 = arith.constant 0 : i32
    return %c0_i32, %c0_i32_0 : i32, i32
  }
  func.func @transform_2(%arg0: i32) -> (i32, i32) {
    %c0_i32 = arith.constant 0 : i32
    %c0_i32_0 = arith.constant 0 : i32
    %c0_i32_1 = arith.constant 0 : i32
    return %c0_i32, %c0_i32_0 : i32, i32
  }
  func.func @transform_3(%arg0: i32) -> (i32, i32) {
    %c0_i32 = arith.constant 0 : i32
    %c0_i32_0 = arith.constant 0 : i32
    return %arg0, %c0_i32 : i32, i32
  }
}

</mosaic_0001>

<llo_original>
// kernel: tpu_custom_call.1
$region0: #{tpu_custom_call.1}
  #allocation0 [shape = 'u32[]', space=smem, size = 0x4, offset = 0x4, fixed_abs, tag = 'smem constant byte address 0x4 - core index']
  #allocation1 [shape = 'u32[72,128]{1,0:T(1,128)}', space=vmem, size = 0x9000, scoped, tag = 'internal scratch']
  %s0 = inlined_call_operand.hbm [shape: f32[8,32], index: 0, kind: input, shape index: {}]
  %s1 = inlined_call_operand.hbm [shape: bf16[32,128], index: 1, kind: input, shape index: {}]
  %s2 = inlined_call_operand.vmem [shape: f32[1,128], index: 2, kind: input, shape index: {}]
  %s3 = inlined_call_operand.hbm [shape: f32[8,128], index: 3, kind: output, shape index: {}]
  %s4 = sld [smem:[#allocation0]]
  $region30: #{tpu_custom_call.1} parent=0
    _
  %s6 = ssub.s32 1, %s4
  %s7 = scalar_select 0, %s6, %s4
  $region1: #{tpu_custom_call.1} parent=0
    #allocation2 [shape = 'u8[4096]{0}', space=vmem, size = 0x1000, scoped, tag = 'input window, operand 0, single buffered']
    #allocation3 [shape = 's32[1]{0}', space=sflag, size = 0x4, scoped, tag = 'scoped memory for tpu_custom_call.1']
    #allocation4 [shape = 's32[1]{0}', space=sflag, size = 0x4, scoped, tag = 'scoped memory for tpu_custom_call.1']
    #allocation5 [shape = 'u8[8192]{0}', space=vmem, size = 0x2000, scoped, tag = 'input window, operand 1, single buffered']
    #allocation6 [shape = 's32[1]{0}', space=sflag, size = 0x4, scoped, tag = 'scoped memory for tpu_custom_call.1']
    #allocation7 [shape = 'u8[4096]{0}', space=vmem, size = 0x1000, scoped, tag = 'output window, operand 0, single buffered']
    %8 = vsyncpa [#allocation3], 0
    %9 = vsyncpa [#allocation6], 0
    %10 = vsyncpa [#allocation4], 0
    // Predicated region
    $region2: #{tpu_custom_call.1} parent=1 // pred_check
      _
    $region3: #{tpu_custom_call.1} parent=1 // pred_check_branch
      %12 = sbr.rel (0) target = $region5
    $region4: #{tpu_custom_call.1} parent=1 // pred_region
      %14 = vsyncadd [#allocation3], 0
      %s16 = sshll.u32 %s0, 4
      %s17 = int_to_ptr.hbm [resolvable:$true] %s16
      %s18 = sshll.u32 [#allocation2], 4
      %s19 = int_to_ptr.vmem [resolvable:$true] %s18
      %21 = dma.hbm_to_vmem [thread:$0]  %s17, 128, %s19, [#allocation3]
    $region5: #{tpu_custom_call.1} parent=1 // pred_fallthru
      _
    // Predicated region
    $region6: #{tpu_custom_call.1} parent=1 // pred_check
      _
    $region7: #{tpu_custom_call.1} parent=1 // pred_check_branch
      %23 = sbr.rel (0) target = $region9
    $region8: #{tpu_custom_call.1} parent=1 // pred_region
      %25 = vsyncadd [#allocation6], 0
      %s26 = sshll.u32 %s1, 4
      %s27 = int_to_ptr.hbm [resolvable:$true] %s26
      %s28 = sshll.u32 [#allocation5], 4
      %s29 = int_to_ptr.vmem [resolvable:$true] %s28
      %34 = dma.hbm_to_vmem [thread:$0]  %s27, 256, %s29, [#allocation6], 64, 64, 4
    $region9: #{tpu_custom_call.1} parent=1 // pred_fallthru
      _
    // Predicated region
    $region10: #{tpu_custom_call.1} parent=1 // pred_check
      _
    $region11: #{tpu_custom_call.1} parent=1 // pred_check_branch
      %36 = sbr.rel (0) target = $region13
    $region12: #{tpu_custom_call.1} parent=1 // pred_region
      _
    $region13: #{tpu_custom_call.1} parent=1 // pred_fallthru
      _
    // Predicated region
    $region14: #{tpu_custom_call.1} parent=1 // pred_check
      _
    $region15: #{tpu_custom_call.1} parent=1 // pred_check_branch
      %38 = sbr.rel (0) target = $region17
    $region16: #{tpu_custom_call.1} parent=1 // pred_region
      %40 = dma.done [#allocation3], 128
    $region17: #{tpu_custom_call.1} parent=1 // pred_fallthru
      _
    // Predicated region
    $region18: #{tpu_custom_call.1} parent=1 // pred_check
      _
    $region19: #{tpu_custom_call.1} parent=1 // pred_check_branch
      %42 = sbr.rel (0) target = $region21
    $region20: #{tpu_custom_call.1} parent=1 // pred_region
      %44 = dma.done [#allocation6], 256
    $region21: #{tpu_custom_call.1} parent=1 // pred_fallthru
      _
    %v46 = vld [vmem:[#allocation2] sm:$0xff]
    %v47 = vmul.f32 %v46, 0.5
    %v48 = vmul.f32 %v46, %v46
    %v49 = vmul.f32 %v48, %v46
    %v50 = vmul.f32 %v49, 0.044715
    %v51 = vadd.f32 %v46, %v50
    %v52 = vmul.f32 %v51, 0.7978846
    %v53 = vtanh.pop %v52
    %v54 = vadd.f32 %v53, 1.0
    %v55 = vmul.f32 %v47, %v54
    %v56 = vpack.c.bf16 %v55, %v55
    %v57 = vld [vmem:[#allocation5] sm:$0xf]
    %v58 = vld [vmem:[#allocation5 + $0x4] sm:$0xf]
    %v59 = vld [vmem:[#allocation5 + $0x8] sm:$0xf]
    %v60 = vld [vmem:[#allocation5 + $0xc] sm:$0xf]
    %v61 = vld [vmem:[%s2] sm:$0x1]
    %v63 = vperm.slane %v61, 0
    %v69 = vunpack.c.l.b16 %v57
    %v70 = vunpack.c.l.b16 %v58
    %v71 = vunpack.c.l.b16 %v59
    %v72 = vunpack.c.l.b16 %v60
    %v73 = vpack.c.b16 %v70, %v69
    %v74 = vpack.c.b16 %v72, %v71
    %vm77 = vcmask 261120
    %v79 = vsel %vm77, %v56, 0
    %81 = vmatpush.bf16.msra.mxu0 0
    %82 = vmatpush.bf16.msra.mxu0 0
    %83 = vmatpush.bf16.msra.mxu0 0
    %84 = vmatpush.bf16.msra.mxu0 0
    %85 = vmatpush.bf16.msra.mxu0 0
    %86 = vmatpush.bf16.msra.mxu0 0
    %87 = vmatpush.bf16.msra.mxu0 %v74
    %88 = vmatpush.bf16.msra.mxu0 %v73
    %89 = vmatmul.bf16.gmra.mxu0 %v79
    %v90 = vpop.f32.mrf.mxu0
    %v91 = vadd.f32 %v63, %v90
    %v92 = vpop.f32.mrf.mxu0
    %93 = vdwg.mxu0
    %94 = vst [vmem:[#allocation7] sm:$0xff] %v91
    // Predicated region
    $region22: #{tpu_custom_call.1} parent=1 // pred_check
      _
    $region23: #{tpu_custom_call.1} parent=1 // pred_check_branch
      %96 = sbr.rel (0) target = $region25
    $region24: #{tpu_custom_call.1} parent=1 // pred_region
      %98 = vsyncadd [#allocation4], 0
      %s100 = sshll.u32 [#allocation7], 4
      %s101 = int_to_ptr.vmem [resolvable:$true] %s100
      %s102 = sshll.u32 %s3, 4
      %s103 = int_to_ptr.hbm [resolvable:$true] %s102
      %105 = dma.vmem_to_hbm [thread:$0]  %s101, 128, %s103, [#allocation4]
    $region25: #{tpu_custom_call.1} parent=1 // pred_fallthru
      _
    // Predicated region
    $region26: #{tpu_custom_call.1} parent=1 // pred_check
      _
    $region27: #{tpu_custom_call.1} parent=1 // pred_check_branch
      %107 = sbr.rel (0) target = $region29
    $region28: #{tpu_custom_call.1} parent=1 // pred_region
      %109 = dma.done [#allocation4], 128
    $region29: #{tpu_custom_call.1} parent=1 // pred_fallthru
      _
    %110 = vsyncpa [#allocation3], 1
    %111 = vsyncpa [#allocation6], 1
    %112 = vsyncpa [#allocation4], 1

</llo_original>
